<compile_context>
chip_gen: v5e
topology: v5e:2x2
jax: 0.10.0
libtpu: 0.0.40
codegen_flags: <defaults>
</compile_context>

<pallas_src>
import functools

import jax
import jax.numpy as jnp
import numpy as np
from jax import lax
from jax.experimental import pallas as pl
from jax.experimental.pallas import tpu as pltpu

EPS = 1e-5  # PyTorch BatchNorm2d default eps


# ----------------------------- Pallas kernel ---------------------------------
def residual_block_kernel(*refs, stride, h_out, has_skip_conv):
    """One (batch, row-tile) grid step of the fused residual block.

    Layout: activations are (rows, W*C) with W*C on the 128-lane axis.
    Weights are pre-lowered "row matrices" that apply the width taps + channel
    mixing (+ folded BN scale) in a single contraction per kh tap.
    """
    if has_skip_conv:
        x_ref, w1_ref, w2_ref, b1_ref, b2_ref, ws_ref, bs_ref, o_ref = refs
    else:
        x_ref, w1_ref, w2_ref, b1_ref, b2_ref, o_ref = refs

    tr = o_ref.shape[1]        # output rows per tile
    d_out = o_ref.shape[2]     # w_out * c_out (lane-dense)
    win_rows = (tr + 1) * stride + 3

    rt = pl.program_id(1)
    row0 = rt * (tr * stride)
    if (tr * stride) % 8 == 0:
        row0 = pl.multiple_of(row0, 8)

    # Halo window of the row-padded input for this tile: (win_rows, W*C_in).
    window = x_ref[0, pl.ds(row0, win_rows), :]

    # ---- conv1 (+ folded bn1 scale): 3 structured matmuls, one per kh ----
    acc1 = jnp.zeros((tr + 2, d_out), jnp.float32)
    for kh in range(3):
        slab = window[kh:kh + (tr + 1) * stride + 1:stride]   # (tr+2, W*C_in)
        acc1 = acc1 + jnp.dot(slab, w1_ref[kh],
                              preferred_element_type=jnp.float32)
    h1 = jnp.maximum(acc1 + b1_ref[...], 0.0)                 # bn1 bias + ReLU

    # Rows of the conv1 output outside [0, h_out) act as conv2's zero padding,
    # so they must be exactly 0 (not relu(bias)): mask the halo rows.
    g = rt * tr - 1 + lax.broadcasted_iota(jnp.int32, (tr + 2, 1), 0)
    h1 = jnp.where((g >= 0) & (g < h_out), h1, 0.0)
    h1c = h1.astype(w2_ref.dtype)

    # ---- conv2 (+ folded bn2 scale), stride 1 ----
    acc2 = jnp.zeros((tr, d_out), jnp.float32)
    for kh in range(3):
        acc2 = acc2 + jnp.dot(h1c[kh:kh + tr], w2_ref[kh],
                              preferred_element_type=jnp.float32)
    h2 = acc2 + b2_ref[...]                                   # bn2 bias

    # ---- skip path: center rows of the input window ----
    centers = window[stride + 1:stride + 1 + (tr - 1) * stride + 1:stride]
    if has_skip_conv:      # 1x1 conv (+ folded bn scale) as one structured matmul
        res = jnp.dot(centers, ws_ref[...],
                      preferred_element_type=jnp.float32) + bs_ref[...]
    else:                  # identity skip: same lane layout as the output
        res = centers.astype(jnp.float32)

    o_ref[0] = jnp.maximum(h2 + res, 0.0).astype(o_ref.dtype)


# ----------------------------- host-side helpers -----------------------------
def _fold_bn(gamma, beta, mean, var):
    """Inference-mode BN -> per-channel (scale, bias)."""
    scale = (gamma / jnp.sqrt(var + EPS)).astype(jnp.float32)
    bias = (beta - mean * scale).astype(jnp.float32)
    return scale, bias


def _width_conv_matrix(taps, in_w, out_w, stride, pad):
    """taps: (k, c_src, c_dst).  Returns the (in_w*c_src, out_w*c_dst) matrix
    applying a k-tap 1-D conv along width (with given stride / zero-pad) with
    the channel mixing folded in:
       out[j*c_dst+co] = sum_{kw,ci} in[(j*stride - pad + kw)*c_src + ci]
                                     * taps[kw, ci, co]
    (out-of-range width indices are dropped, i.e. zero padding)."""
    k, c_src, c_dst = taps.shape
    sel = np.zeros((k, in_w, out_w), np.float32)
    for j in range(out_w):
        for kw in range(k):
            w = j * stride - pad + kw
            if 0 <= w < in_w:
                sel[kw, w, j] = 1.0
    m = (jnp.asarray(sel)[:, :, None, :, None] *
         taps.astype(jnp.float32)[:, None, :, None, :]).sum(axis=0)
    return m.reshape(in_w * c_src, out_w * c_dst)


def _pick_tile_rows(h_out, target=8):
    tr = min(target, h_out)
    while h_out % tr:
        tr -= 1
    return tr


# ------------------------------- wrapper --------------------------------------
def residual_block_forward(x_nchw, params, stride=1, *,
                           compute_dtype=jnp.float32, tile_rows=None):
    n, c_in, h_in, w_in = x_nchw.shape
    c_out = params["w1"].shape[0]
    h_out = (h_in + 2 - 3) // stride + 1
    w_out = (w_in + 2 - 3) // stride + 1
    d_in = w_in * c_in
    d_out = w_out * c_out

    tr = tile_rows if tile_rows is not None else _pick_tile_rows(h_out)
    assert h_out % tr == 0, "tile_rows must divide h_out"
    n_rt = h_out // tr

    # ---- fold BN (eval mode) scales into the conv weights; keep f32 biases ----
    # TODO(synk): training-mode BatchNorm (batch statistics + running-stat
    # updates) is not implemented; this matches module.eval() semantics.
    s1, b1 = _fold_bn(*params["bn1"])
    s2, b2 = _fold_bn(*params["bn2"])
    wt1 = jnp.transpose(params["w1"], (2, 3, 1, 0)) * s1      # (3,3,c_in,c_out)
    wt2 = jnp.transpose(params["w2"], (2, 3, 1, 0)) * s2      # (3,3,c_out,c_out)

    # ---- lower width taps + channel mixing into lane-dense matmul weights ----
    w1_mat = jnp.stack([_width_conv_matrix(wt1[kh], w_in, w_out, stride, 1)
                        for kh in range(3)]).astype(compute_dtype)
    w2_mat = jnp.stack([_width_conv_matrix(wt2[kh], w_out, w_out, 1, 1)
                        for kh in range(3)]).astype(compute_dtype)
    b1_row = jnp.tile(b1, w_out).reshape(1, d_out)
    b2_row = jnp.tile(b2, w_out).reshape(1, d_out)

    has_skip_conv = params["ws"] is not None

    # ---- NCHW -> (N, rows, W*C) with zero row padding only; extra rows let
    #      every row tile read a full (tr+2)-row halo window without branching.
    pad_top = 1 + stride
    pad_bot = 1 + max(0, h_out * stride + 1 - h_in)
    x = jnp.transpose(x_nchw, (0, 2, 3, 1)).astype(jnp.float32)
    x = jnp.pad(x, ((0, 0), (pad_top, pad_bot), (0, 0), (0, 0)))
    x_rows = h_in + pad_top + pad_bot
    x = x.reshape(n, x_rows, d_in).astype(compute_dtype)

    inputs = [x, w1_mat, w2_mat, b1_row, b2_row]
    in_specs = [
        pl.BlockSpec((1, x_rows, d_in), lambda i, r: (i, 0, 0)),
        pl.BlockSpec((3, d_in, d_out), lambda i, r: (0, 0, 0)),
        pl.BlockSpec((3, d_out, d_out), lambda i, r: (0, 0, 0)),
        pl.BlockSpec((1, d_out), lambda i, r: (0, 0)),
        pl.BlockSpec((1, d_out), lambda i, r: (0, 0)),
    ]
    if has_skip_conv:
        ss, bs = _fold_bn(*params["bns"])
        wts = jnp.transpose(params["ws"], (2, 3, 1, 0))[0] * ss   # (1,c_in,c_out)
        ws_mat = _width_conv_matrix(wts, w_in, w_out, stride, 0).astype(compute_dtype)
        bs_row = jnp.tile(bs, w_out).reshape(1, d_out)
        inputs += [ws_mat, bs_row]
        in_specs += [pl.BlockSpec((d_in, d_out), lambda i, r: (0, 0)),
                     pl.BlockSpec((1, d_out), lambda i, r: (0, 0))]

    kern = functools.partial(residual_block_kernel, stride=stride,
                             h_out=h_out, has_skip_conv=has_skip_conv)

    out = pl.pallas_call(
        kern,
        out_shape=jax.ShapeDtypeStruct((n, h_out, d_out), jnp.float32),
        grid_spec=pltpu.PrefetchScalarGridSpec(
            num_scalar_prefetch=0,
            grid=(n, n_rt),
            in_specs=in_specs,
            out_specs=pl.BlockSpec((1, tr, d_out), lambda i, r: (i, r, 0)),
        ),
        compiler_params=pltpu.CompilerParams(
            dimension_semantics=("parallel", "parallel")),
    )(*inputs)

    out = out.reshape(n, h_out, w_out, c_out)
    return jnp.transpose(out, (0, 3, 1, 2))   # back to NCHW


# ----------------------------- pure-JAX reference -----------------------------
def _ref_forward(x, p, stride):
    def conv(x, w, s, pad):
        return lax.conv_general_dilated(
            x, w, (s, s), [(pad, pad), (pad, pad)],
            dimension_numbers=("NCHW", "OIHW", "NCHW"))

    def bn(x, stats):
        g, b, m, v = stats
        g, b, m, v = [t[None, :, None, None] for t in (g, b, m, v)]
        return (x - m) / jnp.sqrt(v + EPS) * g + b

    residual = x if p["ws"] is None else bn(conv(x, p["ws"], stride, 0), p["bns"])
    h = jnp.maximum(bn(conv(x, p["w1"], stride, 1), p["bn1"]), 0.0)
    h = bn(conv(h, p["w2"], 1, 1), p["bn2"])
    return jnp.maximum(h + residual, 0.0)


def _init_params(key, c_in, c_out, stride):
    ks = jax.random.split(key, 16)

    def bn_stats(k):
        k1, k2, k3, k4 = jax.random.split(k, 4)
        gamma = 1.0 + 0.1 * jax.random.normal(k1, (c_out,), jnp.float32)
        beta = 0.1 * jax.random.normal(k2, (c_out,), jnp.float32)
        mean = 0.1 * jax.random.normal(k3, (c_out,), jnp.float32)
        var = jax.random.uniform(k4, (c_out,), jnp.float32, 0.5, 1.5)
        return (gamma, beta, mean, var)

    p = {
        "w1": 0.2 * jax.random.normal(ks[0], (c_out, c_in, 3, 3), jnp.float32),
        "w2": 0.2 * jax.random.normal(ks[1], (c_out, c_out, 3, 3), jnp.float32),
        "bn1": bn_stats(ks[2]),
        "bn2": bn_stats(ks[3]),
    }
    if stride != 1 or c_in != c_out:
        p["ws"] = 0.2 * jax.random.normal(ks[4], (c_out, c_in, 1, 1), jnp.float32)
        p["bns"] = bn_stats(ks[5])
    else:
        p["ws"] = None
        p["bns"] = None
    return p


if __name__ == "__main__":
    def run_case(case_id, n, c_in, c_out, h, w, stride, *,
                 compute_dtype=jnp.float32, tile_rows=None, tol=5e-4,
                 interpret=False):
        kx, kp = jax.random.split(jax.random.fold_in(jax.random.PRNGKey(0),
                                                     case_id))
        x = jax.random.normal(kx, (n, c_in, h, w), jnp.float32)
        params = _init_params(kp, c_in, c_out, stride)
        if interpret:
            with pltpu.force_tpu_interpret_mode():
                out = residual_block_forward(x, params, stride=stride,
                                             compute_dtype=compute_dtype,
                                             tile_rows=tile_rows)
                out = jax.block_until_ready(out)
        else:
            out = residual_block_forward(x, params, stride=stride,
                                         compute_dtype=compute_dtype,
                                         tile_rows=tile_rows)
            out = jax.block_until_ready(out)
        ref = _ref_forward(x, params, stride)
        np.testing.assert_allclose(np.asarray(out), np.asarray(ref),
                                   rtol=tol, atol=tol)

    # 1) conv-skip path (c_in != c_out), stride 1, f32 -- the primary config.
    run_case(0, 2, 4, 8, 16, 16, 1)
    # 2) identity-skip specialization (c_in == c_out, stride 1), f32.
    run_case(1, 2, 8, 8, 16, 16, 1)
    # 3) bf16 activations/weights (f32 accumulation) -- reduced-traffic mode.
    run_case(2, 2, 4, 8, 16, 16, 1, compute_dtype=jnp.bfloat16, tol=5e-2)
    # 4) stride=2 / multi-row-tile halo math validated in the TPU interpreter.
    # TODO(synk): validate the stride>1 (strided value slice) path on real
    # hardware lowering as well; only stride=1 is exercised on-chip here.
    run_case(3, 2, 4, 8, 32, 32, 2, tile_rows=8, interpret=True)

    print("KERNEL_OK")
</pallas_src>

<mosaic_0001>
module attributes {stable_mosaic.version = 11 : i64} {
  func.func @residual_block_kernel(%arg0: i32, %arg1: i32, %arg2: memref<1x20x64xf32, #tpu.memory_space<vmem>>, %arg3: memref<3x64x128xf32, #tpu.memory_space<vmem>>, %arg4: memref<3x128x128xf32, #tpu.memory_space<vmem>>, %arg5: memref<1x128xf32, #tpu.memory_space<vmem>>, %arg6: memref<1x128xf32, #tpu.memory_space<vmem>>, %arg7: memref<64x128xf32, #tpu.memory_space<vmem>>, %arg8: memref<1x128xf32, #tpu.memory_space<vmem>>, %arg9: memref<1x8x128xf32, #tpu.memory_space<vmem>>) attributes {dimension_semantics = [#tpu.dimension_semantics<parallel>, #tpu.dimension_semantics<parallel>], iteration_bounds = array<i64: 2, 2>, scalar_prefetch = 0 : i64, scratch_operands = 0 : i64, tpu.core_type = #tpu.core_type<tc>, window_params = [{transform_indices = @transform_0, window_bounds = array<i64: 1, 20, 64>}, {pipeline_mode = #tpu.pipeline_mode<synchronous>, transform_indices = @transform_1, window_bounds = array<i64: 3, 64, 128>}, {pipeline_mode = #tpu.pipeline_mode<synchronous>, transform_indices = @transform_2, window_bounds = array<i64: 3, 128, 128>}, {pipeline_mode = #tpu.pipeline_mode<synchronous>, transform_indices = @transform_3, window_bounds = array<i64: 1, 128>}, {pipeline_mode = #tpu.pipeline_mode<synchronous>, transform_indices = @transform_4, window_bounds = array<i64: 1, 128>}, {pipeline_mode = #tpu.pipeline_mode<synchronous>, transform_indices = @transform_5, window_bounds = array<i64: 64, 128>}, {pipeline_mode = #tpu.pipeline_mode<synchronous>, transform_indices = @transform_6, window_bounds = array<i64: 1, 128>}, {transform_indices = @transform_7, window_bounds = array<i64: 1, 8, 128>}]} {
    %c8_i32 = arith.constant 8 : i32
    %0 = arith.muli %arg1, %c8_i32 : i32
    %1 = tpu.assume_multiple %0, 8 : i32
    %c0 = arith.constant 0 : index
    %2 = arith.index_cast %1 : i32 to index
    %c0_0 = arith.constant 0 : index
    %3 = vector.load %arg2[%c0, %2, %c0_0] : memref<1x20x64xf32, #tpu.memory_space<vmem>>, vector<1x12x64xf32>
    %4 = vector.shape_cast %3 : vector<1x12x64xf32> to vector<12x64xf32>
    %cst = arith.constant 0.000000e+00 : f32
    %5 = vector.broadcast %cst : f32 to vector<10x128xf32>
    %6 = vector.extract_strided_slice %4 {offsets = [0, 0], sizes = [10, 64], strides = [1, 1]} : vector<12x64xf32> to vector<10x64xf32>
    %c0_1 = arith.constant 0 : index
    %c0_2 = arith.constant 0 : index
    %c0_3 = arith.constant 0 : index
    %7 = vector.load %arg3[%c0_1, %c0_2, %c0_3] : memref<3x64x128xf32, #tpu.memory_space<vmem>>, vector<1x64x128xf32>
    %8 = vector.shape_cast %7 : vector<1x64x128xf32> to vector<64x128xf32>
    %cst_4 = arith.constant dense<0.000000e+00> : vector<10x128xf32>
    %9 = tpu.matmul %6, %8, %cst_4 {dimension_numbers = #tpu.dot_dimension_numbers<[1], [0], [0], [1], [0, 0, 1, 1], [], []>} : vector<10x64xf32>, vector<64x128xf32>, vector<10x128xf32> -> vector<10x128xf32>
    %10 = arith.addf %5, %9 : vector<10x128xf32>
    %11 = vector.extract_strided_slice %4 {offsets = [1, 0], sizes = [10, 64], strides = [1, 1]} : vector<12x64xf32> to vector<10x64xf32>
    %c1 = arith.constant 1 : index
    %c0_5 = arith.constant 0 : index
    %c0_6 = arith.constant 0 : index
    %12 = vector.load %arg3[%c1, %c0_5, %c0_6] : memref<3x64x128xf32, #tpu.memory_space<vmem>>, vector<1x64x128xf32>
    %13 = vector.shape_cast %12 : vector<1x64x128xf32> to vector<64x128xf32>
    %cst_7 = arith.constant dense<0.000000e+00> : vector<10x128xf32>
    %14 = tpu.matmul %11, %13, %cst_7 {dimension_numbers = #tpu.dot_dimension_numbers<[1], [0], [0], [1], [0, 0, 1, 1], [], []>} : vector<10x64xf32>, vector<64x128xf32>, vector<10x128xf32> -> vector<10x128xf32>
    %15 = arith.addf %10, %14 : vector<10x128xf32>
    %16 = vector.extract_strided_slice %4 {offsets = [2, 0], sizes = [10, 64], strides = [1, 1]} : vector<12x64xf32> to vector<10x64xf32>
    %c2 = arith.constant 2 : index
    %c0_8 = arith.constant 0 : index
    %c0_9 = arith.constant 0 : index
    %17 = vector.load %arg3[%c2, %c0_8, %c0_9] : memref<3x64x128xf32, #tpu.memory_space<vmem>>, vector<1x64x128xf32>
    %18 = vector.shape_cast %17 : vector<1x64x128xf32> to vector<64x128xf32>
    %cst_10 = arith.constant dense<0.000000e+00> : vector<10x128xf32>
    %19 = tpu.matmul %16, %18, %cst_10 {dimension_numbers = #tpu.dot_dimension_numbers<[1], [0], [0], [1], [0, 0, 1, 1], [], []>} : vector<10x64xf32>, vector<64x128xf32>, vector<10x128xf32> -> vector<10x128xf32>
    %20 = arith.addf %15, %19 : vector<10x128xf32>
    %c0_11 = arith.constant 0 : index
    %c0_12 = arith.constant 0 : index
    %21 = vector.load %arg5[%c0_11, %c0_12] : memref<1x128xf32, #tpu.memory_space<vmem>>, vector<1x128xf32>
    %22 = vector.broadcast %21 : vector<1x128xf32> to vector<10x128xf32>
    %23 = arith.addf %20, %22 : vector<10x128xf32>
    %cst_13 = arith.constant 0.000000e+00 : f32
    %24 = vector.broadcast %cst_13 : f32 to vector<10x128xf32>
    %25 = arith.maximumf %23, %24 : vector<10x128xf32>
    %c8_i32_14 = arith.constant 8 : i32
    %26 = arith.muli %arg1, %c8_i32_14 : i32
    %c1_i32 = arith.constant 1 : i32
    %27 = arith.subi %26, %c1_i32 : i32
    %28 = tpu.iota {dimensions = array<i32: 0>} : vector<10x1xi32>
    %29 = vector.broadcast %27 : i32 to vector<10x1xi32>
    %30 = arith.addi %29, %28 : vector<10x1xi32>
    %c0_i32 = arith.constant 0 : i32
    %31 = vector.broadcast %c0_i32 : i32 to vector<10x1xi32>
    %32 = arith.cmpi sge, %30, %31 : vector<10x1xi32>
    %c16_i32 = arith.constant 16 : i32
    %33 = vector.broadcast %c16_i32 : i32 to vector<10x1xi32>
    %34 = arith.cmpi slt, %30, %33 : vector<10x1xi32>
    %35 = arith.andi %32, %34 : vector<10x1xi1>
    %cst_15 = arith.constant 0.000000e+00 : f32
    %36 = vector.shape_cast %35 : vector<10x1xi1> to vector<10x1xi1>
    %37 = vector.broadcast %36 : vector<10x1xi1> to vector<10x128xi1>
    %38 = vector.broadcast %cst_15 : f32 to vector<10x128xf32>
    %39 = arith.select %37, %25, %38 : vector<10x128xi1>, vector<10x128xf32>
    %cst_16 = arith.constant 0.000000e+00 : f32
    %40 = vector.broadcast %cst_16 : f32 to vector<8x128xf32>
    %41 = vector.extract_strided_slice %39 {offsets = [0, 0], sizes = [8, 128], strides = [1, 1]} : vector<10x128xf32> to vector<8x128xf32>
    %c0_17 = arith.constant 0 : index
    %c0_18 = arith.constant 0 : index
    %c0_19 = arith.constant 0 : index
    %42 = vector.load %arg4[%c0_17, %c0_18, %c0_19] : memref<3x128x128xf32, #tpu.memory_space<vmem>>, vector<1x128x128xf32>
    %43 = vector.shape_cast %42 : vector<1x128x128xf32> to vector<128x128xf32>
    %cst_20 = arith.constant dense<0.000000e+00> : vector<8x128xf32>
    %44 = tpu.matmul %41, %43, %cst_20 {dimension_numbers = #tpu.dot_dimension_numbers<[1], [0], [0], [1], [0, 0, 1, 1], [], []>} : vector<8x128xf32>, vector<128x128xf32>, vector<8x128xf32> -> vector<8x128xf32>
    %45 = arith.addf %40, %44 : vector<8x128xf32>
    %46 = vector.extract_strided_slice %39 {offsets = [1, 0], sizes = [8, 128], strides = [1, 1]} : vector<10x128xf32> to vector<8x128xf32>
    %c1_21 = arith.constant 1 : index
    %c0_22 = arith.constant 0 : index
    %c0_23 = arith.constant 0 : index
    %47 = vector.load %arg4[%c1_21, %c0_22, %c0_23] : memref<3x128x128xf32, #tpu.memory_space<vmem>>, vector<1x128x128xf32>
    %48 = vector.shape_cast %47 : vector<1x128x128xf32> to vector<128x128xf32>
    %cst_24 = arith.constant dense<0.000000e+00> : vector<8x128xf32>
    %49 = tpu.matmul %46, %48, %cst_24 {dimension_numbers = #tpu.dot_dimension_numbers<[1], [0], [0], [1], [0, 0, 1, 1], [], []>} : vector<8x128xf32>, vector<128x128xf32>, vector<8x128xf32> -> vector<8x128xf32>
    %50 = arith.addf %45, %49 : vector<8x128xf32>
    %51 = vector.extract_strided_slice %39 {offsets = [2, 0], sizes = [8, 128], strides = [1, 1]} : vector<10x128xf32> to vector<8x128xf32>
    %c2_25 = arith.constant 2 : index
    %c0_26 = arith.constant 0 : index
    %c0_27 = arith.constant 0 : index
    %52 = vector.load %arg4[%c2_25, %c0_26, %c0_27] : memref<3x128x128xf32, #tpu.memory_space<vmem>>, vector<1x128x128xf32>
    %53 = vector.shape_cast %52 : vector<1x128x128xf32> to vector<128x128xf32>
    %cst_28 = arith.constant dense<0.000000e+00> : vector<8x128xf32>
    %54 = tpu.matmul %51, %53, %cst_28 {dimension_numbers = #tpu.dot_dimension_numbers<[1], [0], [0], [1], [0, 0, 1, 1], [], []>} : vector<8x128xf32>, vector<128x128xf32>, vector<8x128xf32> -> vector<8x128xf32>
    %55 = arith.addf %50, %54 : vector<8x128xf32>
    %c0_29 = arith.constant 0 : index
    %c0_30 = arith.constant 0 : index
    %56 = vector.load %arg6[%c0_29, %c0_30] : memref<1x128xf32, #tpu.memory_space<vmem>>, vector<1x128xf32>
    %57 = vector.broadcast %56 : vector<1x128xf32> to vector<8x128xf32>
    %58 = arith.addf %55, %57 : vector<8x128xf32>
    %59 = vector.extract_strided_slice %4 {offsets = [2, 0], sizes = [8, 64], strides = [1, 1]} : vector<12x64xf32> to vector<8x64xf32>
    %c0_31 = arith.constant 0 : index
    %c0_32 = arith.constant 0 : index
    %60 = vector.load %arg7[%c0_31, %c0_32] : memref<64x128xf32, #tpu.memory_space<vmem>>, vector<64x128xf32>
    %cst_33 = arith.constant dense<0.000000e+00> : vector<8x128xf32>
    %61 = tpu.matmul %59, %60, %cst_33 {dimension_numbers = #tpu.dot_dimension_numbers<[1], [0], [0], [1], [0, 0, 1, 1], [], []>} : vector<8x64xf32>, vector<64x128xf32>, vector<8x128xf32> -> vector<8x128xf32>
    %c0_34 = arith.constant 0 : index
    %c0_35 = arith.constant 0 : index
    %62 = vector.load %arg8[%c0_34, %c0_35] : memref<1x128xf32, #tpu.memory_space<vmem>>, vector<1x128xf32>
    %63 = vector.broadcast %62 : vector<1x128xf32> to vector<8x128xf32>
    %64 = arith.addf %61, %63 : vector<8x128xf32>
    %65 = arith.addf %58, %64 : vector<8x128xf32>
    %cst_36 = arith.constant 0.000000e+00 : f32
    %66 = vector.broadcast %cst_36 : f32 to vector<8x128xf32>
    %67 = arith.maximumf %65, %66 : vector<8x128xf32>
    %c0_37 = arith.constant 0 : index
    %c0_38 = arith.constant 0 : index
    %c0_39 = arith.constant 0 : index
    %68 = vector.load %arg9[%c0_37, %c0_38, %c0_39] : memref<1x8x128xf32, #tpu.memory_space<vmem>>, vector<1x8x128xf32>
    %69 = vector.shape_cast %68 : vector<1x8x128xf32> to vector<8x128xf32>
    %70 = vector.shape_cast %67 : vector<8x128xf32> to vector<1x8x128xf32>
    tpu.vector_store %arg9[%c0_37, %c0_38, %c0_39], %70 {strides = array<i32>} : memref<1x8x128xf32, #tpu.memory_space<vmem>>, vector<1x8x128xf32>,
    return
  }
  func.func @transform_0(%arg0: i32, %arg1: i32) -> (i32, i32, i32) {
    %c0_i32 = arith.constant 0 : i32
    %c0_i32_0 = arith.constant 0 : i32
    %c0_i32_1 = arith.constant 0 : i32
    return %arg0, %c0_i32, %c0_i32_0 : i32, i32, i32
  }
  func.func @transform_1(%arg0: i32, %arg1: i32) -> (i32, i32, i32) {
    %c0_i32 = arith.constant 0 : i32
    %c0_i32_0 = arith.constant 0 : i32
    %c0_i32_1 = arith.constant 0 : i32
    %c0_i32_2 = arith.constant 0 : i32
    return %c0_i32, %c0_i32_0, %c0_i32_1 : i32, i32, i32
  }
  func.func @transform_2(%arg0: i32, %arg1: i32) -> (i32, i32, i32) {
    %c0_i32 = arith.constant 0 : i32
    %c0_i32_0 = arith.constant 0 : i32
    %c0_i32_1 = arith.constant 0 : i32
    %c0_i32_2 = arith.constant 0 : i32
    return %c0_i32, %c0_i32_0, %c0_i32_1 : i32, i32, i32
  }
  func.func @transform_3(%arg0: i32, %arg1: i32) -> (i32, i32) {
    %c0_i32 = arith.constant 0 : i32
    %c0_i32_0 = arith.constant 0 : i32
    %c0_i32_1 = arith.constant 0 : i32
    return %c0_i32, %c0_i32_0 : i32, i32
  }
  func.func @transform_4(%arg0: i32, %arg1: i32) -> (i32, i32) {
    %c0_i32 = arith.constant 0 : i32
    %c0_i32_0 = arith.constant 0 : i32
    %c0_i32_1 = arith.constant 0 : i32
    return %c0_i32, %c0_i32_0 : i32, i32
  }
  func.func @transform_5(%arg0: i32, %arg1: i32) -> (i32, i32) {
    %c0_i32 = arith.constant 0 : i32
    %c0_i32_0 = arith.constant 0 : i32
    %c0_i32_1 = arith.constant 0 : i32
    return %c0_i32, %c0_i32_0 : i32, i32
  }
  func.func @transform_6(%arg0: i32, %arg1: i32) -> (i32, i32) {
    %c0_i32 = arith.constant 0 : i32
    %c0_i32_0 = arith.constant 0 : i32
    %c0_i32_1 = arith.constant 0 : i32
    return %c0_i32, %c0_i32_0 : i32, i32
  }
  func.func @transform_7(%arg0: i32, %arg1: i32) -> (i32, i32, i32) {
    %c0_i32 = arith.constant 0 : i32
    %c0_i32_0 = arith.constant 0 : i32
    return %arg0, %arg1, %c0_i32 : i32, i32, i32
  }
}

</mosaic_0001>

<llo_original>
// kernel: tpu_custom_call.1
$region0: #{tpu_custom_call.1}
  #allocation0 [shape = 'u32[]', space=smem, size = 0x4, offset = 0x4, fixed_abs, tag = 'smem constant byte address 0x4 - core index']
  #allocation1 [shape = 'u32[72,128]{1,0:T(1,128)}', space=vmem, size = 0x9000, scoped, tag = 'internal scratch']
  %s0 = inlined_call_operand.vmem [shape: f32[2,20,64], index: 0, kind: input, shape index: {}]
  %s1 = inlined_call_operand.hbm [shape: f32[3,64,128], index: 1, kind: input, shape index: {}]
  %s2 = inlined_call_operand.hbm [shape: f32[3,128,128], index: 2, kind: input, shape index: {}]
  %s3 = inlined_call_operand.vmem [shape: f32[1,128], index: 3, kind: input, shape index: {}]
  %s4 = inlined_call_operand.vmem [shape: f32[1,128], index: 4, kind: input, shape index: {}]
  %s5 = inlined_call_operand.vmem [shape: f32[64,128], index: 5, kind: input, shape index: {}]
  %s6 = inlined_call_operand.vmem [shape: f32[1,128], index: 6, kind: input, shape index: {}]
  %s7 = inlined_call_operand.hbm [shape: f32[2,16,128], index: 7, kind: output, shape index: {}]
  %s8 = sld [smem:[#allocation0]]
  $region69: #{tpu_custom_call.1} parent=0
    _
  %s10 = ssub.s32 1, %s8
  %s11 = scalar_select 0, %s10, %s8
  $region1: #{tpu_custom_call.1} parent=0
    #allocation2 [shape = 'u8[98304]{0}', space=vmem, size = 0x18000, scoped, tag = 'input window, operand 1, single buffered']
    #allocation3 [shape = 's32[2]{0}', space=sflag, size = 0x8, scoped, tag = 'scoped memory for tpu_custom_call.1']
    #allocation4 [shape = 's32[2]{0}', space=sflag, size = 0x8, scoped, tag = 'scoped memory for tpu_custom_call.1']
    #allocation5 [shape = 'u8[196608]{0}', space=vmem, size = 0x30000, scoped, tag = 'input window, operand 2, single buffered']
    #allocation6 [shape = 's32[1]{0}', space=sflag, size = 0x4, scoped, tag = 'scoped memory for tpu_custom_call.1']
    #allocation7 [shape = 'u8[8192]{0}', space=vmem, size = 0x2000, scoped, tag = 'output window, operand 0']
    %12 = vsyncpa [#allocation3], 0
    %13 = vsyncpa [#allocation6], 0
    %14 = vsyncpa [#allocation4], 0
    %s15 = scalar_lea.sflag [#allocation4], 1
    %16 = vsyncpa %s15, 0
    loop: start=0, step=1, limit=6
    $region2: #{tpu_custom_call.1} parent=1 // loop_pre_header
      _
    $region3: #{tpu_custom_call.1} parent=1 // loop_header
      %s18 = sphi 0, %s22
      %p19 = scmp.ge.s32.totalorder %s18, 6
      %s25 = sphi 0, %s37
      %s26 = sphi 0, %s33
      %s27 = sphi 0, %s25
      %s28 = sphi 0, %s26
      %s29 = sphi 0, %s27
      %s30 = sphi 0, %s28
      %s40 = sphi 0, %s42
      %s43 = sphi 0, %s40
      %s44 = sphi 0, %s43
      %s60 = sphi 0, %s44
      %s64 = sphi 0, %s64
      %s66 = sphi 0, %s64
      %s67 = sphi 0, %s66
      %s81 = sphi 0, %s67
      %s85 = sphi 0, %s85
      %s87 = sphi 0, %s85
      %s88 = sphi 0, %s87
      %s102 = sphi 0, %s88
      %s106 = sphi 0, %s106
      %s108 = sphi 0, %s106
      %s109 = sphi 0, %s108
      %s123 = sphi 0, %s109
      %s127 = sphi 0, %s127
      %s129 = sphi 0, %s127
      %s130 = sphi 0, %s129
      %s144 = sphi 0, %s130
      %s148 = sphi 0, %s148
      %s150 = sphi 0, %s148
      %s151 = sphi 0, %s150
      %s165 = sphi 0, %s151
      %s169 = sphi 0, %s169
      %s171 = sphi 0, %s169
      %s172 = sphi 0, %s171
      %s186 = sphi 0, %s172
      %s194 = sphi 0, %s196
      %s197 = sphi 0, %s194
      %s198 = sphi 0, %s197
      %s214 = sphi 0, %s198
    $region4: #{tpu_custom_call.1} parent=1 // loop_header_branch
      %21 = sbr.rel (%p19) target = $region8
    $region5: #{tpu_custom_call.1} parent=1 // loop_body
      %s23 = ssub.s32 %s18, 1
      %s24 = ssub.s32 %s18, 2
      %s31 = sadd.s32 1, %s26
      %p32 = scmp.ge.s32.totalorder %s31, 2
      %s33 = scalar_select %p32, 0, %s31
      %s34 = sadd.s32 1, %s25
      %s35 = scalar_select %p32, %s34, %s25
      %p36 = scmp.ge.s32.totalorder %s35, 2
      %s37 = scalar_select %p36, 0, %s35
      %s38 = ssub.s32 %s25, %s37
      %p39 = scmp.eq.s32.totalorder %s38, 0
      %s41 = sadd.s32 %s40, 1
      %s42 = scalar_select %p39, %s40, %s41
      %p45 = pneg %p39
      %p46 = scmp.eq.s32.totalorder %s18, 3
      %p47 = por %p45, %p46
      %p48 = scmp.ne.s32.totalorder %s40, %s43
      %p49 = scmp.eq.s32.totalorder %s18, 0
      %p50 = por %p48, %p49
      %p51 = scmp.ne.s32.totalorder %s40, %s43
      %p52 = scmp.eq.s32.totalorder %s23, 3
      %p53 = por %p51, %p52
      %p54 = scmp.ne.s32.totalorder %s43, %s44
      %p55 = scmp.eq.s32.totalorder %s23, 0
      %p56 = por %p54, %p55
      %p57 = scmp.ne.s32.totalorder %s43, %s44
      %p58 = scmp.eq.s32.totalorder %s24, 3
      %p59 = por %p57, %p58
      %p61 = scmp.ne.s32.totalorder %s44, %s60
      %p62 = scmp.eq.s32.totalorder %s24, 0
      %p63 = por %p61, %p62
      %s65 = sadd.s32 %s64, 1
      %p68 = scmp.eq.s32.totalorder %s18, 3
      %p69 = scmp.ne.s32.totalorder %s64, %s66
      %p70 = scmp.eq.s32.totalorder %s18, 0
      %p71 = por %p69, %p70
      %p72 = scmp.ne.s32.totalorder %s64, %s66
      %p73 = scmp.eq.s32.totalorder %s23, 3
      %p74 = por %p72, %p73
      %p75 = scmp.ne.s32.totalorder %s66, %s67
      %p76 = scmp.eq.s32.totalorder %s23, 0
      %p77 = por %p75, %p76
      %p78 = scmp.ne.s32.totalorder %s66, %s67
      %p79 = scmp.eq.s32.totalorder %s24, 3
      %p80 = por %p78, %p79
      %p82 = scmp.ne.s32.totalorder %s67, %s81
      %p83 = scmp.eq.s32.totalorder %s24, 0
      %p84 = por %p82, %p83
      %s86 = sadd.s32 %s85, 1
      %p89 = scmp.eq.s32.totalorder %s18, 3
      %p90 = scmp.ne.s32.totalorder %s85, %s87
      %p91 = scmp.eq.s32.totalorder %s18, 0
      %p92 = por %p90, %p91
      %p93 = scmp.ne.s32.totalorder %s85, %s87
      %p94 = scmp.eq.s32.totalorder %s23, 3
      %p95 = por %p93, %p94
      %p96 = scmp.ne.s32.totalorder %s87, %s88
      %p97 = scmp.eq.s32.totalorder %s23, 0
      %p98 = por %p96, %p97
      %p99 = scmp.ne.s32.totalorder %s87, %s88
      %p100 = scmp.eq.s32.totalorder %s24, 3
      %p101 = por %p99, %p100
      %p103 = scmp.ne.s32.totalorder %s88, %s102
      %p104 = scmp.eq.s32.totalorder %s24, 0
      %p105 = por %p103, %p104
      %s107 = sadd.s32 %s106, 1
      %p110 = scmp.eq.s32.totalorder %s18, 3
      %p111 = scmp.ne.s32.totalorder %s106, %s108
      %p112 = scmp.eq.s32.totalorder %s18, 0
      %p113 = por %p111, %p112
      %p114 = scmp.ne.s32.totalorder %s106, %s108
      %p115 = scmp.eq.s32.totalorder %s23, 3
      %p116 = por %p114, %p115
      %p117 = scmp.ne.s32.totalorder %s108, %s109
      %p118 = scmp.eq.s32.totalorder %s23, 0
      %p119 = por %p117, %p118
      %p120 = scmp.ne.s32.totalorder %s108, %s109
      %p121 = scmp.eq.s32.totalorder %s24, 3
      %p122 = por %p120, %p121
      %p124 = scmp.ne.s32.totalorder %s109, %s123
      %p125 = scmp.eq.s32.totalorder %s24, 0
      %p126 = por %p124, %p125
      %s128 = sadd.s32 %s127, 1
      %p131 = scmp.eq.s32.totalorder %s18, 3
      %p132 = scmp.ne.s32.totalorder %s127, %s129
      %p133 = scmp.eq.s32.totalorder %s18, 0
      %p134 = por %p132, %p133
      %p135 = scmp.ne.s32.totalorder %s127, %s129
      %p136 = scmp.eq.s32.totalorder %s23, 3
      %p137 = por %p135, %p136
      %p138 = scmp.ne.s32.totalorder %s129, %s130
      %p139 = scmp.eq.s32.totalorder %s23, 0
      %p140 = por %p138, %p139
      %p141 = scmp.ne.s32.totalorder %s129, %s130
      %p142 = scmp.eq.s32.totalorder %s24, 3
      %p143 = por %p141, %p142
      %p145 = scmp.ne.s32.totalorder %s130, %s144
      %p146 = scmp.eq.s32.totalorder %s24, 0
      %p147 = por %p145, %p146
      %s149 = sadd.s32 %s148, 1
      %p152 = scmp.eq.s32.totalorder %s18, 3
      %p153 = scmp.ne.s32.totalorder %s148, %s150
      %p154 = scmp.eq.s32.totalorder %s18, 0
      %p155 = por %p153, %p154
      %p156 = scmp.ne.s32.totalorder %s148, %s150
      %p157 = scmp.eq.s32.totalorder %s23, 3
      %p158 = por %p156, %p157
      %p159 = scmp.ne.s32.totalorder %s150, %s151
      %p160 = scmp.eq.s32.totalorder %s23, 0
      %p161 = por %p159, %p160
      %p162 = scmp.ne.s32.totalorder %s150, %s151
      %p163 = scmp.eq.s32.totalorder %s24, 3
      %p164 = por %p162, %p163
      %p166 = scmp.ne.s32.totalorder %s151, %s165
      %p167 = scmp.eq.s32.totalorder %s24, 0
      %p168 = por %p166, %p167
      %s170 = sadd.s32 %s169, 1
      %p173 = scmp.eq.s32.totalorder %s18, 3
      %p174 = scmp.ne.s32.totalorder %s169, %s171
      %p175 = scmp.eq.s32.totalorder %s18, 0
      %p176 = por %p174, %p175
      %p177 = scmp.ne.s32.totalorder %s169, %s171
      %p178 = scmp.eq.s32.totalorder %s23, 3
      %p179 = por %p177, %p178
      %p180 = scmp.ne.s32.totalorder %s171, %s172
      %p181 = scmp.eq.s32.totalorder %s23, 0
      %p182 = por %p180, %p181
      %p183 = scmp.ne.s32.totalorder %s171, %s172
      %p184 = scmp.eq.s32.totalorder %s24, 3
      %p185 = por %p183, %p184
      %p187 = scmp.ne.s32.totalorder %s172, %s186
      %p188 = scmp.eq.s32.totalorder %s24, 0
      %p189 = por %p187, %p188
      %s190 = ssub.s32 %s25, %s37
      %s191 = ssub.s32 %s26, %s33
      %s192 = sor.u32 %s190, %s191
      %p193 = scmp.eq.s32.totalorder %s192, 0
      %s195 = sadd.s32 %s194, 1
      %s196 = scalar_select %p193, %s194, %s195
      %p199 = pneg %p193
      %p200 = scmp.eq.s32.totalorder %s18, 3
      %p201 = por %p199, %p200
      %p202 = scmp.ne.s32.totalorder %s194, %s197
      %p203 = scmp.eq.s32.totalorder %s18, 0
      %p204 = por %p202, %p203
      %p205 = scmp.ne.s32.totalorder %s194, %s197
      %p206 = scmp.eq.s32.totalorder %s23, 3
      %p207 = por %p205, %p206
      %p208 = scmp.ne.s32.totalorder %s197, %s198
      %p209 = scmp.eq.s32.totalorder %s23, 0
      %p210 = por %p208, %p209
      %p211 = scmp.ne.s32.totalorder %s197, %s198
      %p212 = scmp.eq.s32.totalorder %s24, 3
      %p213 = por %p211, %p212
      %p215 = scmp.ne.s32.totalorder %s198, %s214
      %p216 = scmp.eq.s32.totalorder %s24, 0
      %p217 = por %p215, %p216
      %p218 = scmp.le.s32.totalorder 1, %s18
      %p219 = scmp.lt.s32.totalorder %s18, 5
      %p220 = pnand %p218, %p219
      %p221 = pneg %p220
      // Predicated region
      $region9: #{tpu_custom_call.1} parent=5 // pred_check
        _
      $region10: #{tpu_custom_call.1} parent=5 // pred_check_branch
        %223 = sbr.rel (%p220) target = $region12
      $region11: #{tpu_custom_call.1} parent=5 // pred_region
        %s224 = ssub.s32 %s18, 1
        // Predicated region
        $region13: #{tpu_custom_call.1} parent=11 // pred_check
          %p225 = pneg %p77
        $region14: #{tpu_custom_call.1} parent=11 // pred_check_branch
          %227 = sbr.rel (%p225) target = $region16
        $region15: #{tpu_custom_call.1} parent=11 // pred_region
          %229 = vsyncadd [#allocation3], 0
          %s230 = sshll.u32 %s1, 4
          %s231 = int_to_ptr.hbm [resolvable:$true] %s230
          %s232 = sshll.u32 [#allocation2], 4
          %s233 = int_to_ptr.vmem [resolvable:$true] %s232
          %238 = dma.hbm_to_vmem [thread:$0]  %s231, 3072, %s233, [#allocation3], 128, 128, 8
        $region16: #{tpu_custom_call.1} parent=11 // pred_fallthru
          _
        // Predicated region
        $region17: #{tpu_custom_call.1} parent=11 // pred_check
          %p239 = pneg %p98
        $region18: #{tpu_custom_call.1} parent=11 // pred_check_branch
          %241 = sbr.rel (%p239) target = $region20
        $region19: #{tpu_custom_call.1} parent=11 // pred_region
          %243 = vsyncadd [#allocation6], 0
          %s244 = sshll.u32 %s2, 4
          %s245 = int_to_ptr.hbm [resolvable:$true] %s244
          %s246 = sshll.u32 [#allocation5], 4
          %s247 = int_to_ptr.vmem [resolvable:$true] %s246
          %252 = dma.hbm_to_vmem [thread:$0]  %s245, 6144, %s247, [#allocation6], 128, 128, 8
        $region20: #{tpu_custom_call.1} parent=11 // pred_fallthru
          _
        // Predicated region
        $region21: #{tpu_custom_call.1} parent=11 // pred_check
          %p253 = pneg %p119
        $region22: #{tpu_custom_call.1} parent=11 // pred_check_branch
          %255 = sbr.rel (%p253) target = $region24
        $region23: #{tpu_custom_call.1} parent=11 // pred_region
          _
        $region24: #{tpu_custom_call.1} parent=11 // pred_fallthru
          _
        // Predicated region
        $region25: #{tpu_custom_call.1} parent=11 // pred_check
          %p256 = pneg %p140
        $region26: #{tpu_custom_call.1} parent=11 // pred_check_branch
          %258 = sbr.rel (%p256) target = $region28
        $region27: #{tpu_custom_call.1} parent=11 // pred_region
          _
        $region28: #{tpu_custom_call.1} parent=11 // pred_fallthru
          _
        // Predicated region
        $region29: #{tpu_custom_call.1} parent=11 // pred_check
          %p259 = pneg %p161
        $region30: #{tpu_custom_call.1} parent=11 // pred_check_branch
          %261 = sbr.rel (%p259) target = $region32
        $region31: #{tpu_custom_call.1} parent=11 // pred_region
          _
        $region32: #{tpu_custom_call.1} parent=11 // pred_fallthru
          _
        // Predicated region
        $region33: #{tpu_custom_call.1} parent=11 // pred_check
          %p262 = pneg %p182
        $region34: #{tpu_custom_call.1} parent=11 // pred_check_branch
          %264 = sbr.rel (%p262) target = $region36
        $region35: #{tpu_custom_call.1} parent=11 // pred_region
          _
        $region36: #{tpu_custom_call.1} parent=11 // pred_fallthru
          _
      $region12: #{tpu_custom_call.1} parent=5 // pred_fallthru
        _
      %p265 = scmp.lt.s32.totalorder %s18, 4
      // Predicated region
      $region37: #{tpu_custom_call.1} parent=5 // pred_check
        %p266 = pneg %p265
      $region38: #{tpu_custom_call.1} parent=5 // pred_check_branch
        %268 = sbr.rel (%p266) target = $region40
      $region39: #{tpu_custom_call.1} parent=5 // pred_region
        // Predicated region
        $region41: #{tpu_custom_call.1} parent=39 // pred_check
          %p269 = pneg %p50
        $region42: #{tpu_custom_call.1} parent=39 // pred_check_branch
          %271 = sbr.rel (%p269) target = $region44
        $region43: #{tpu_custom_call.1} parent=39 // pred_region
          %p272 = scmp.lt.s32.totalorder %s25, 1
          %s273 = scalar_select %p272, %s25, 1
          %s274 = smul.addr %s273, 3
          %s275 = smul.addr %s274, 8
          %s276 = scalar_lea.vmem %s0, %s275
        $region44: #{tpu_custom_call.1} parent=39 // pred_fallthru
          _
      $region40: #{tpu_custom_call.1} parent=5 // pred_fallthru
        _
      %p277 = scmp.le.s32.totalorder 1, %s18
      %p278 = scmp.lt.s32.totalorder %s18, 5
      %p279 = pnand %p277, %p278
      %p280 = pneg %p279
      // Predicated region
      $region45: #{tpu_custom_call.1} parent=5 // pred_check
        _
      $region46: #{tpu_custom_call.1} parent=5 // pred_check_branch
        %282 = sbr.rel (%p279) target = $region48
      $region47: #{tpu_custom_call.1} parent=5 // pred_region
        %s283 = ssub.s32 %s18, 1
        // Predicated region
        $region49: #{tpu_custom_call.1} parent=47 // pred_check
          %p284 = pneg %p77
        $region50: #{tpu_custom_call.1} parent=47 // pred_check_branch
          %286 = sbr.rel (%p284) target = $region52
        $region51: #{tpu_custom_call.1} parent=47 // pred_region
          %288 = dma.done [#allocation3], 3072
        $region52: #{tpu_custom_call.1} parent=47 // pred_fallthru
          _
        // Predicated region
        $region53: #{tpu_custom_call.1} parent=47 // pred_check
          %p289 = pneg %p98
        $region54: #{tpu_custom_call.1} parent=47 // pred_check_branch
          %291 = sbr.rel (%p289) target = $region56
        $region55: #{tpu_custom_call.1} parent=47 // pred_region
          %293 = dma.done [#allocation6], 6144
        $region56: #{tpu_custom_call.1} parent=47 // pred_fallthru
          _
        %p294 = scmp.lt.s32.totalorder %s27, 1
        %s295 = scalar_select %p294, %s27, 1
        %s296 = smul.addr %s295, 3
        %s297 = smul.addr %s296, 8
        %s298 = scalar_lea.vmem %s0, %s297
        %p299 = pneg %p56
        %p300 = pneg %p53
        %p301 = pneg %p77
        %p302 = pneg %p74
        %p303 = pneg %p98
        %p304 = pneg %p95
        %p305 = pneg %p119
        %p306 = pneg %p116
        %p307 = pneg %p140
        %p308 = pneg %p137
        %p309 = pneg %p161
        %p310 = pneg %p158
        %p311 = pneg %p182
        %p312 = pneg %p179
        %p313 = pneg %p210
        %p314 = pneg %p207
        %s315 = sand.u32 %s197, 1
        %s316 = scalar_lea.sflag [#allocation4], %s315
        %s317 = sand.u32 %s197, 1
        %s318 = smul.addr %s317, 8
        %s319 = scalar_lea.vmem [#allocation7], %s318
        %p320 = scmp.lt.s32.totalorder %s27, 1
        %s321 = scalar_select %p320, %s27, 1
        %s322 = smul.addr %s321, 3
        %s323 = smul.addr %s322, 8
        %s324 = scalar_lea.vmem %s0, %s323
        %s325 = smul.u32 %s28, 8
        %s326 = scalar_lea.vmem %s324, %s325
        %v327 = vld [vmem:[%s326] sm:$0xff]
        %v328 = vld [vmem:[%s326 + $0x8] sm:$0xf]
        %v329 = vld [vmem:[#allocation2] sm:$0xff]
        %v330 = vld [vmem:[#allocation2 + $0x8] sm:$0xff]
        %v331 = vld [vmem:[#allocation2 + $0x10] sm:$0xff]
        %v332 = vld [vmem:[#allocation2 + $0x18] sm:$0xff]
        %v333 = vld [vmem:[#allocation2 + $0x20] sm:$0xff]
        %v334 = vld [vmem:[#allocation2 + $0x28] sm:$0xff]
        %v335 = vld [vmem:[#allocation2 + $0x30] sm:$0xff]
        %v336 = vld [vmem:[#allocation2 + $0x38] sm:$0xff]
        %s337 = scalar_lea.vmem [#allocation2], 64
        %v338 = vld [vmem:[%s337] sm:$0xff]
        %v339 = vld [vmem:[%s337 + $0x8] sm:$0xff]
        %v340 = vld [vmem:[%s337 + $0x10] sm:$0xff]
        %v341 = vld [vmem:[%s337 + $0x18] sm:$0xff]
        %v342 = vld [vmem:[%s337 + $0x20] sm:$0xff]
        %v343 = vld [vmem:[%s337 + $0x28] sm:$0xff]
        %v344 = vld [vmem:[%s337 + $0x30] sm:$0xff]
        %v345 = vld [vmem:[%s337 + $0x38] sm:$0xff]
        %vm348 = vcmask 1046528
        %v349 = vrot.slane %v327, 1
        %v350 = vrot.slane %v328, 1
        %v351 = vsel %vm348, %v349, %v350
        %vm352 = vcmask 523264
        %v353 = vsel %vm352, %v351, 0
        %v355 = vsel %vm352, %v350, 0
        %357 = vmatpush.msra.mxu0 0.0
        %358 = vmatpush.msra.mxu0 0.0
        %359 = vmatpush.msra.mxu0 0.0
        %360 = vmatpush.msra.mxu0 0.0
        %361 = vmatpush.msra.mxu0 0.0
        %362 = vmatpush.msra.mxu0 0.0
        %363 = vmatpush.msra.mxu0 0.0
        %364 = vmatpush.msra.mxu0 0.0
        %365 = vmatpush.msra.mxu0 %v345
        %366 = vmatpush.msra.mxu0 %v344
        %367 = vmatpush.msra.mxu0 %v343
        %368 = vmatpush.msra.mxu0 %v342
        %369 = vmatpush.msra.mxu0 %v341
        %370 = vmatpush.msra.mxu0 %v340
        %371 = vmatpush.msra.mxu0 %v339
        %372 = vmatpush.msra.mxu0 %v338
        %373 = vmatmul.f32.gmra.mxu0 %v353
        %v374 = vpop.f32.mrf.mxu0
        %v375 = vadd.f32 0.0, %v374
        %376 = vmatmul.f32.gmra.mxu0 %v355
        %v377 = vpop.f32.mrf.mxu0
        %v378 = vadd.f32 0.0, %v377
        %379 = vdwg.mxu0
        %v380 = vsel %vm352, %v327, 0
        %v382 = vsel %vm352, %v328, 0
        %384 = vmatpush.msra.mxu0 0.0
        %385 = vmatpush.msra.mxu0 0.0
        %386 = vmatpush.msra.mxu0 0.0
        %387 = vmatpush.msra.mxu0 0.0
        %388 = vmatpush.msra.mxu0 0.0
        %389 = vmatpush.msra.mxu0 0.0
        %390 = vmatpush.msra.mxu0 0.0
        %391 = vmatpush.msra.mxu0 0.0
        %392 = vmatpush.msra.mxu0 %v336
        %393 = vmatpush.msra.mxu0 %v335
        %394 = vmatpush.msra.mxu0 %v334
        %395 = vmatpush.msra.mxu0 %v333
        %396 = vmatpush.msra.mxu0 %v332
        %397 = vmatpush.msra.mxu0 %v331
        %398 = vmatpush.msra.mxu0 %v330
        %399 = vmatpush.msra.mxu0 %v329
        %400 = vmatmul.f32.gmra.mxu0 %v380
        %v401 = vpop.f32.mrf.mxu0
        %v402 = vadd.f32 %v375, %v401
        %403 = vmatmul.f32.gmra.mxu0 %v382
        %v404 = vpop.f32.mrf.mxu0
        %v405 = vadd.f32 %v378, %v404
        %406 = vdwg.mxu0
        %s407 = scalar_lea.vmem [#allocation2], 128
        %v408 = vld [vmem:[%s407] sm:$0xff]
        %v409 = vld [vmem:[%s407 + $0x8] sm:$0xff]
        %v410 = vld [vmem:[%s407 + $0x10] sm:$0xff]
        %v411 = vld [vmem:[%s407 + $0x18] sm:$0xff]
        %v412 = vld [vmem:[%s407 + $0x20] sm:$0xff]
        %v413 = vld [vmem:[%s407 + $0x28] sm:$0xff]
        %v414 = vld [vmem:[%s407 + $0x30] sm:$0xff]
        %v415 = vld [vmem:[%s407 + $0x38] sm:$0xff]
        %vm416 = vcmask 1045504
        %v417 = vrot.slane %v327, 2
        %v418 = vrot.slane %v328, 2
        %v419 = vsel %vm416, %v417, %v418
        %v420 = vsel %vm352, %v419, 0
        %v422 = vsel %vm352, %v418, 0
        %424 = vmatpush.msra.mxu0 0.0
        %425 = vmatpush.msra.mxu0 0.0
        %426 = vmatpush.msra.mxu0 0.0
        %427 = vmatpush.msra.mxu0 0.0
        %428 = vmatpush.msra.mxu0 0.0
        %429 = vmatpush.msra.mxu0 0.0
        %430 = vmatpush.msra.mxu0 0.0
        %431 = vmatpush.msra.mxu0 0.0
        %432 = vmatpush.msra.mxu0 %v415
        %433 = vmatpush.msra.mxu0 %v414
        %434 = vmatpush.msra.mxu0 %v413
        %435 = vmatpush.msra.mxu0 %v412
        %436 = vmatpush.msra.mxu0 %v411
        %437 = vmatpush.msra.mxu0 %v410
        %438 = vmatpush.msra.mxu0 %v409
        %439 = vmatpush.msra.mxu0 %v408
        %440 = vmatmul.f32.gmra.mxu0 %v420
        %v441 = vpop.f32.mrf.mxu0
        %v442 = vadd.f32 0.0, %v441
        %443 = vmatmul.f32.gmra.mxu0 %v422
        %v444 = vpop.f32.mrf.mxu0
        %v445 = vadd.f32 0.0, %v444
        %446 = vdwg.mxu0
        %v447 = vadd.f32 %v402, %v442
        %v448 = vadd.f32 %v405, %v445
        %v449 = vld [vmem:[%s3] sm:$0x1]
        %v451 = vperm.slane %v449, 0
        %v453 = vadd.f32 %v447, %v451
        %v454 = vadd.f32 %v448, %v451
        %v455 = vmax.f32 %v453, 0.0
        %v456 = vmax.f32 %v454, 0.0
        %s457 = ssub.s32 %s325, 1
        %v458 = vlaneseq
        %v459 = vshrl.u32 %v458, 7
        %v460 = vadd.s32 %v459, 8
        %v461 = vstv %s457
        %v462 = vadd.s32 %v461, %v459
        %v463 = vadd.s32 %v461, %v460
        %vm464 = vcmp.ge.s32.totalorder %v462, 0
        %vm465 = vcmp.ge.s32.totalorder %v463, 0
        %vm466 = vcmp.lt.s32.totalorder %v462, 16
        %vm467 = vcmp.lt.s32.totalorder %v463, 16
        %vm468 = vmand %vm464, %vm466
        %vm469 = vmand %vm465, %vm467
        %v470 = vsel %vm468, 1, 0
        %v471 = vsel %vm469, 1, 0
        %vm472 = vcmp.eq.s32.totalorder %v470, 1
        %vm473 = vcmp.eq.s32.totalorder %v471, 1
        %v474 = vsel %vm472, %v455, 0.0
        %v475 = vsel %vm473, %v456, 0.0
        %v476 = vld [vmem:[#allocation5] sm:$0xff]
        %v477 = vld [vmem:[#allocation5 + $0x8] sm:$0xff]
        %v478 = vld [vmem:[#allocation5 + $0x10] sm:$0xff]
        %v479 = vld [vmem:[#allocation5 + $0x18] sm:$0xff]
        %v480 = vld [vmem:[#allocation5 + $0x20] sm:$0xff]
        %v481 = vld [vmem:[#allocation5 + $0x28] sm:$0xff]
        %v482 = vld [vmem:[#allocation5 + $0x30] sm:$0xff]
        %v483 = vld [vmem:[#allocation5 + $0x38] sm:$0xff]
        %v484 = vld [vmem:[#allocation5 + $0x40] sm:$0xff]
        %v485 = vld [vmem:[#allocation5 + $0x48] sm:$0xff]
        %v486 = vld [vmem:[#allocation5 + $0x50] sm:$0xff]
        %v487 = vld [vmem:[#allocation5 + $0x58] sm:$0xff]
        %v488 = vld [vmem:[#allocation5 + $0x60] sm:$0xff]
        %v489 = vld [vmem:[#allocation5 + $0x68] sm:$0xff]
        %v490 = vld [vmem:[#allocation5 + $0x70] sm:$0xff]
        %v491 = vld [vmem:[#allocation5 + $0x78] sm:$0xff]
        %s492 = scalar_lea.vmem [#allocation5], 128
        %v493 = vld [vmem:[%s492] sm:$0xff]
        %v494 = vld [vmem:[%s492 + $0x8] sm:$0xff]
        %v495 = vld [vmem:[%s492 + $0x10] sm:$0xff]
        %v496 = vld [vmem:[%s492 + $0x18] sm:$0xff]
        %v497 = vld [vmem:[%s492 + $0x20] sm:$0xff]
        %v498 = vld [vmem:[%s492 + $0x28] sm:$0xff]
        %v499 = vld [vmem:[%s492 + $0x30] sm:$0xff]
        %v500 = vld [vmem:[%s492 + $0x38] sm:$0xff]
        %v501 = vld [vmem:[%s492 + $0x40] sm:$0xff]
        %v502 = vld [vmem:[%s492 + $0x48] sm:$0xff]
        %v503 = vld [vmem:[%s492 + $0x50] sm:$0xff]
        %v504 = vld [vmem:[%s492 + $0x58] sm:$0xff]
        %v505 = vld [vmem:[%s492 + $0x60] sm:$0xff]
        %v506 = vld [vmem:[%s492 + $0x68] sm:$0xff]
        %v507 = vld [vmem:[%s492 + $0x70] sm:$0xff]
        %v508 = vld [vmem:[%s492 + $0x78] sm:$0xff]
        %v511 = vrot.slane %v474, 1
        %v512 = vrot.slane %v475, 1
        %v513 = vsel %vm348, %v511, %v512
        %515 = vmatpush.msra.mxu0 %v508
        %516 = vmatpush.msra.mxu0 %v507
        %517 = vmatpush.msra.mxu0 %v506
        %518 = vmatpush.msra.mxu0 %v505
        %519 = vmatpush.msra.mxu0 %v504
        %520 = vmatpush.msra.mxu0 %v503
        %521 = vmatpush.msra.mxu0 %v502
        %522 = vmatpush.msra.mxu0 %v501
        %523 = vmatpush.msra.mxu0 %v500
        %524 = vmatpush.msra.mxu0 %v499
        %525 = vmatpush.msra.mxu0 %v498
        %526 = vmatpush.msra.mxu0 %v497
        %527 = vmatpush.msra.mxu0 %v496
        %528 = vmatpush.msra.mxu0 %v495
        %529 = vmatpush.msra.mxu0 %v494
        %530 = vmatpush.msra.mxu0 %v493
        %531 = vmatmul.f32.gmra.mxu0 %v513
        %v532 = vpop.f32.mrf.mxu0
        %v533 = vadd.f32 0.0, %v532
        %534 = vdwg.mxu0
        %535 = vmatpush.msra.mxu0 %v491
        %536 = vmatpush.msra.mxu0 %v490
        %537 = vmatpush.msra.mxu0 %v489
        %538 = vmatpush.msra.mxu0 %v488
        %539 = vmatpush.msra.mxu0 %v487
        %540 = vmatpush.msra.mxu0 %v486
        %541 = vmatpush.msra.mxu0 %v485
        %542 = vmatpush.msra.mxu0 %v484
        %543 = vmatpush.msra.mxu0 %v483
        %544 = vmatpush.msra.mxu0 %v482
        %545 = vmatpush.msra.mxu0 %v481
        %546 = vmatpush.msra.mxu0 %v480
        %547 = vmatpush.msra.mxu0 %v479
        %548 = vmatpush.msra.mxu0 %v478
        %549 = vmatpush.msra.mxu0 %v477
        %550 = vmatpush.msra.mxu0 %v476
        %551 = vmatmul.f32.gmra.mxu0 %v474
        %v552 = vpop.f32.mrf.mxu0
        %v553 = vadd.f32 %v533, %v552
        %554 = vdwg.mxu0
        %s555 = scalar_lea.vmem [#allocation5], 256
        %v556 = vld [vmem:[%s555] sm:$0xff]
        %v557 = vld [vmem:[%s555 + $0x8] sm:$0xff]
        %v558 = vld [vmem:[%s555 + $0x10] sm:$0xff]
        %v559 = vld [vmem:[%s555 + $0x18] sm:$0xff]
        %v560 = vld [vmem:[%s555 + $0x20] sm:$0xff]
        %v561 = vld [vmem:[%s555 + $0x28] sm:$0xff]
        %v562 = vld [vmem:[%s555 + $0x30] sm:$0xff]
        %v563 = vld [vmem:[%s555 + $0x38] sm:$0xff]
        %v564 = vld [vmem:[%s555 + $0x40] sm:$0xff]
        %v565 = vld [vmem:[%s555 + $0x48] sm:$0xff]
        %v566 = vld [vmem:[%s555 + $0x50] sm:$0xff]
        %v567 = vld [vmem:[%s555 + $0x58] sm:$0xff]
        %v568 = vld [vmem:[%s555 + $0x60] sm:$0xff]
        %v569 = vld [vmem:[%s555 + $0x68] sm:$0xff]
        %v570 = vld [vmem:[%s555 + $0x70] sm:$0xff]
        %v571 = vld [vmem:[%s555 + $0x78] sm:$0xff]
        %v572 = vrot.slane %v474, 2
        %v573 = vrot.slane %v475, 2
        %v574 = vsel %vm416, %v572, %v573
        %576 = vmatpush.msra.mxu0 %v571
        %577 = vmatpush.msra.mxu0 %v570
        %578 = vmatpush.msra.mxu0 %v569
        %579 = vmatpush.msra.mxu0 %v568
        %580 = vmatpush.msra.mxu0 %v567
        %581 = vmatpush.msra.mxu0 %v566
        %582 = vmatpush.msra.mxu0 %v565
        %583 = vmatpush.msra.mxu0 %v564
        %584 = vmatpush.msra.mxu0 %v563
        %585 = vmatpush.msra.mxu0 %v562
        %586 = vmatpush.msra.mxu0 %v561
        %587 = vmatpush.msra.mxu0 %v560
        %588 = vmatpush.msra.mxu0 %v559
        %589 = vmatpush.msra.mxu0 %v558
        %590 = vmatpush.msra.mxu0 %v557
        %591 = vmatpush.msra.mxu0 %v556
        %592 = vmatmul.f32.gmra.mxu0 %v574
        %v593 = vpop.f32.mrf.mxu0
        %v594 = vadd.f32 0.0, %v593
        %595 = vdwg.mxu0
        %v596 = vadd.f32 %v553, %v594
        %v597 = vld [vmem:[%s4] sm:$0x1]
        %v599 = vperm.slane %v597, 0
        %v601 = vadd.f32 %v596, %v599
        %v602 = vld [vmem:[%s5] sm:$0xff]
        %v603 = vld [vmem:[%s5 + $0x8] sm:$0xff]
        %v604 = vld [vmem:[%s5 + $0x10] sm:$0xff]
        %v605 = vld [vmem:[%s5 + $0x18] sm:$0xff]
        %v606 = vld [vmem:[%s5 + $0x20] sm:$0xff]
        %v607 = vld [vmem:[%s5 + $0x28] sm:$0xff]
        %v608 = vld [vmem:[%s5 + $0x30] sm:$0xff]
        %v609 = vld [vmem:[%s5 + $0x38] sm:$0xff]
        %v610 = vld [vmem:[%s6] sm:$0x1]
        %v612 = vperm.slane %v610, 0
        %614 = vmatpush.msra.mxu0 0.0
        %615 = vmatpush.msra.mxu0 0.0
        %616 = vmatpush.msra.mxu0 0.0
        %617 = vmatpush.msra.mxu0 0.0
        %618 = vmatpush.msra.mxu0 0.0
        %619 = vmatpush.msra.mxu0 0.0
        %620 = vmatpush.msra.mxu0 0.0
        %621 = vmatpush.msra.mxu0 0.0
        %622 = vmatpush.msra.mxu0 %v609
        %623 = vmatpush.msra.mxu0 %v608
        %624 = vmatpush.msra.mxu0 %v607
        %625 = vmatpush.msra.mxu0 %v606
        %626 = vmatpush.msra.mxu0 %v605
        %627 = vmatpush.msra.mxu0 %v604
        %628 = vmatpush.msra.mxu0 %v603
        %629 = vmatpush.msra.mxu0 %v602
        %630 = vmatmul.f32.gmra.mxu0 %v420
        %v631 = vpop.f32.mrf.mxu0
        %v632 = vadd.f32 %v612, %v631
        %633 = vdwg.mxu0
        %v634 = vadd.f32 %v601, %v632
        %v635 = vmax.f32 %v634, 0.0
        %636 = vst [vmem:[%s319] sm:$0xff] %v635
        %s637 = sand.u32 %s197, 1
        %s638 = scalar_lea.sflag [#allocation4], %s637
        %s639 = sand.u32 %s197, 1
        %s640 = smul.addr %s639, 8
        %s641 = scalar_lea.vmem [#allocation7], %s640
        // Predicated region
        $region57: #{tpu_custom_call.1} parent=47 // pred_check
          %p642 = pneg %p207
        $region58: #{tpu_custom_call.1} parent=47 // pred_check_branch
          %644 = sbr.rel (%p642) target = $region60
        $region59: #{tpu_custom_call.1} parent=47 // pred_region
          %646 = vsyncadd %s638, 0
          %s647 = smul.addr %s27, 2
          %s648 = sadd.s32 %s28, %s647
          %s649 = smul.addr %s648, 8
          %s650 = scalar_lea.hbm %s7, %s649
          %s652 = sshll.u32 %s641, 4
          %s653 = int_to_ptr.vmem [resolvable:$true] %s652
          %s654 = sshll.u32 %s650, 4
          %s655 = int_to_ptr.hbm [resolvable:$true] %s654
          %657 = dma.vmem_to_hbm [thread:$0]  %s653, 128, %s655, %s638
        $region60: #{tpu_custom_call.1} parent=47 // pred_fallthru
          _
      $region48: #{tpu_custom_call.1} parent=5 // pred_fallthru
        _
      %p658 = scmp.le.s32.totalorder 2, %s18
      // Predicated region
      $region61: #{tpu_custom_call.1} parent=5 // pred_check
        %p659 = pneg %p658
      $region62: #{tpu_custom_call.1} parent=5 // pred_check_branch
        %661 = sbr.rel (%p659) target = $region64
      $region63: #{tpu_custom_call.1} parent=5 // pred_region
        %s662 = ssub.s32 %s18, 2
        // Predicated region
        $region65: #{tpu_custom_call.1} parent=63 // pred_check
          %p663 = pneg %p213
        $region66: #{tpu_custom_call.1} parent=63 // pred_check_branch
          %665 = sbr.rel (%p663) target = $region68
        $region67: #{tpu_custom_call.1} parent=63 // pred_region
          %s666 = sand.u32 %s198, 1
          %s667 = scalar_lea.sflag [#allocation4], %s666
          %s668 = sand.u32 %s198, 1
          %s669 = smul.addr %s668, 8
          %s670 = scalar_lea.vmem [#allocation7], %s669
          %672 = dma.done %s667, 128
        $region68: #{tpu_custom_call.1} parent=63 // pred_fallthru
          _
      $region64: #{tpu_custom_call.1} parent=5 // pred_fallthru
        _
    $region6: #{tpu_custom_call.1} parent=1 // loop_footer
      %s22 = sadd.s32 1, %s18
    $region7: #{tpu_custom_call.1} parent=1 // loop_footer_branch
      %17 = sbr.rel target = $region3
    $region8: #{tpu_custom_call.1} parent=1 // loop_exit
      _
    %673 = vsyncpa [#allocation3], 1
    %s674 = scalar_lea.sflag [#allocation3], 1
    %675 = vsyncpa %s674, 1
    %676 = vsyncpa [#allocation6], 1
    %677 = vsyncpa [#allocation4], 1
    %s678 = scalar_lea.sflag [#allocation4], 1
    %679 = vsyncpa %s678, 1

</llo_original>
